<compile_context>
chip_gen: v7x
topology: tpu7x:2x2x1
jax: 0.10.0
libtpu: 0.0.40
codegen_flags: <defaults>
</compile_context>

<pallas_src>
import math

import jax
import jax.numpy as jnp
from jax.experimental import pallas as pl
from jax.experimental.pallas import tpu as pltpu


def _round_up(x, m):
    return ((x + m - 1) // m) * m


# ----------------------------------------------------------------------------
# Kernel: one row tile of  relu(relu(sum_i x_i @ W1_i + b1) @ W2 + b2)
# ----------------------------------------------------------------------------
def _make_gmta_kernel(num_inputs):
    def kernel(*refs):
        x_refs = refs[:num_inputs]
        w1_refs = refs[num_inputs:2 * num_inputs]
        b1_ref, w2_ref, b2_ref, o_ref = refs[2 * num_inputs:]

        # hidden = relu( sum_i x_i @ W1_i + b1 ) -- bf16 operands, f32 accumulate.
        h = jnp.dot(x_refs[0][...].astype(w1_refs[0].dtype), w1_refs[0][...],
                    preferred_element_type=jnp.float32)
        for i in range(1, num_inputs):
            h += jnp.dot(x_refs[i][...].astype(w1_refs[i].dtype), w1_refs[i][...],
                         preferred_element_type=jnp.float32)
        h = jnp.maximum(h + b1_ref[...], 0.0)            # f32 elementwise (v5e-safe)

        # out = relu(hidden @ W2 + b2)
        y = jnp.dot(h.astype(w2_ref.dtype), w2_ref[...],
                    preferred_element_type=jnp.float32)
        o_ref[...] = jnp.maximum(y + b2_ref[...], 0.0).astype(o_ref.dtype)

    return kernel


# ----------------------------------------------------------------------------
# Glue (hoisted): fuse the per-type scaling / transpose once per parameter set.
# ----------------------------------------------------------------------------
def fuse_gmta_weights(params, types, edge_weights, *, compute_dtype=jnp.bfloat16):
    """Per-input W1 blocks (scaled, transposed, hidden-padded) + padded b1/W2/b2."""
    n_edges = len(edge_weights)
    ew = jnp.asarray(edge_weights, dtype=jnp.float32)   # traced, not baked floats

    hidden = params["bias"].shape[0]
    out_features = params["lin_w"].shape[0]
    h_pad = _round_up(hidden, 128)
    # TODO(synk): pad hidden/out to multiples of 256 on v6e/v7x when they exceed 128.

    blocks = [
        (ew[i] / n_edges) * params["weight_per_type"][t].T for i, t in enumerate(types)
    ]
    blocks.append(params["node_self_loop_weight"].T)     # self-loop input is last

    # Zero hidden-padding is exact: padded hidden cols give relu(0+0)=0 which then
    # hit zero rows of W2.
    w1_blocks = tuple(
        jnp.zeros((blk.shape[0], h_pad), compute_dtype)
        .at[:, :hidden].set(blk.astype(compute_dtype))
        for blk in blocks
    )
    w2 = (jnp.zeros((h_pad, out_features), compute_dtype)
          .at[:hidden, :].set(params["lin_w"].T.astype(compute_dtype)))
    b1 = (jnp.zeros((1, h_pad), jnp.float32)
          .at[0, :hidden].set(params["bias"].astype(jnp.float32)))
    b2 = params["lin_b"].astype(jnp.float32).reshape(1, out_features)

    return {"w1_blocks": w1_blocks, "b1": b1, "w2": w2, "b2": b2,
            "hidden": hidden, "out_features": out_features}


def _choose_row_tile(n, tile_m):
    if n <= 8:
        return n                           # single full-array block (== array dim)
    # >= 2 grid steps once N is big enough so both v7x TensorCores get work.
    tm = min(tile_m, _round_up(pl.cdiv(n, 2), 16))
    tm = min(tm, (n // 8) * 8)             # never larger than the row count
    return max(tm, 8)


# ----------------------------------------------------------------------------
# Apply: run the gridded Pallas kernel directly on the un-staged inputs.
# ----------------------------------------------------------------------------
def gmta_apply(fused, inputs, *, tile_m=1024, out_dtype=jnp.bfloat16):
    num_inputs = len(inputs)
    assert num_inputs == len(fused["w1_blocks"]), "inputs/types mismatch"
    n = inputs[0].shape[0]
    o = fused["out_features"]
    h_pad = fused["w2"].shape[0]

    tm = _choose_row_tile(n, tile_m)
    grid = (pl.cdiv(n, tm),)

    in_specs = (
        # x_i: one row tile per grid step (double-buffered by Pallas).  Last dim
        # equals the full per-input feature width, so no lane padding / staging.
        [pl.BlockSpec((tm, x.shape[1]), lambda i: (i, 0)) for x in inputs]
        # Weights / biases: constant index_map -> VMEM-resident across the grid.
        # TODO(synk): for production-sized hidden dims, add
        # pipeline_mode=pl.Buffered(1) here and set vmem_limit_bytes headroom
        # (matters on v7x with 64 MiB VMEM); at these sizes it is negligible.
        + [pl.BlockSpec(w.shape, lambda i: (0, 0)) for w in fused["w1_blocks"]]
        + [pl.BlockSpec(fused["b1"].shape, lambda i: (0, 0)),
           pl.BlockSpec(fused["w2"].shape, lambda i: (0, 0)),
           pl.BlockSpec(fused["b2"].shape, lambda i: (0, 0))]
    )

    sum_in = sum(x.shape[1] for x in inputs)
    flops = 2 * n * (sum_in * h_pad + h_pad * o)
    bytes_accessed = (
        sum(x.size * x.dtype.itemsize for x in inputs)
        + sum(w.size * w.dtype.itemsize for w in fused["w1_blocks"])
        + fused["w2"].size * fused["w2"].dtype.itemsize
        + fused["b1"].size * fused["b1"].dtype.itemsize
        + fused["b2"].size * fused["b2"].dtype.itemsize
        + n * o * jnp.dtype(out_dtype).itemsize
    )

    return pl.pallas_call(
        _make_gmta_kernel(num_inputs),
        out_shape=jax.ShapeDtypeStruct((n, o), out_dtype),
        grid=grid,
        in_specs=in_specs,
        out_specs=pl.BlockSpec((tm, o), lambda i: (i, 0)),
        compiler_params=pltpu.CompilerParams(
            dimension_semantics=("parallel",),   # megacore sharding on v7x
        ),
        cost_estimate=pl.CostEstimate(
            flops=flops, transcendentals=0, bytes_accessed=bytes_accessed),
    )(*inputs, *fused["w1_blocks"], fused["b1"], fused["w2"], fused["b2"])


def gmta_forward(params, inputs, types, edge_weights, *, tile_m=1024,
                 out_dtype=jnp.bfloat16):
    """Convenience wrapper: fuse weights + run the kernel in one call."""
    fused = fuse_gmta_weights(params, types, edge_weights)
    return gmta_apply(fused, inputs, tile_m=tile_m, out_dtype=out_dtype)


# ----------------------------------------------------------------------------
# References for verification.
# ----------------------------------------------------------------------------
def gmta_reference_f32(params, inputs, types, edge_weights):
    """Pure-f32 JAX reference mirroring the PyTorch forward."""
    n_edges = len(edge_weights)
    ew = jnp.asarray(edge_weights, dtype=jnp.float32)
    blocks = [
        (ew[i] / n_edges) * params["weight_per_type"][t].T for i, t in enumerate(types)
    ]
    blocks.append(params["node_self_loop_weight"].T)
    weight = jnp.concatenate(blocks, axis=0)
    x = jnp.concatenate(inputs, axis=-1)
    h = jax.nn.relu(x @ weight + params["bias"])
    return jax.nn.relu(h @ params["lin_w"].T + params["lin_b"])


def gmta_reference_bf16(params, inputs, types, edge_weights):
    """Reference with the same bf16-operand / f32-accumulate matmuls as the kernel."""
    n_edges = len(edge_weights)
    ew = jnp.asarray(edge_weights, dtype=jnp.float32)
    blocks = [
        (ew[i] / n_edges) * params["weight_per_type"][t].T for i, t in enumerate(types)
    ]
    blocks.append(params["node_self_loop_weight"].T)
    w1 = jnp.concatenate(blocks, axis=0)
    x = jnp.concatenate(inputs, axis=-1)
    h = jnp.dot(x.astype(jnp.bfloat16), w1.astype(jnp.bfloat16),
                preferred_element_type=jnp.float32)
    h = jax.nn.relu(h + params["bias"])
    y = jnp.dot(h.astype(jnp.bfloat16), params["lin_w"].T.astype(jnp.bfloat16),
                preferred_element_type=jnp.float32)
    return jax.nn.relu(y + params["lin_b"])


# ----------------------------------------------------------------------------
# Init mirroring reset_parameters() + nn.Linear defaults.
# ----------------------------------------------------------------------------
def init_params(key, in_features, hidden_features, out_features, types):
    keys = jax.random.split(key, types + 4)
    weight_per_type = []
    for i in range(types):
        bound = 1.0 / math.sqrt(in_features[i])
        weight_per_type.append(
            jax.random.uniform(
                keys[i], (hidden_features, in_features[i]), jnp.float32, -bound, bound
            )
        )
    bound0 = 1.0 / math.sqrt(in_features[0])
    node_self_loop_weight = jax.random.uniform(
        keys[types], (hidden_features, in_features[0]), jnp.float32, -bound0, bound0
    )
    bias = jax.random.uniform(
        keys[types + 1], (hidden_features,), jnp.float32, -bound0, bound0
    )
    lb = 1.0 / math.sqrt(hidden_features)
    lin_w = jax.random.uniform(
        keys[types + 2], (out_features, hidden_features), jnp.float32, -lb, lb
    )
    lin_b = jax.random.uniform(keys[types + 3], (out_features,), jnp.float32, -lb, lb)
    return {
        "weight_per_type": weight_per_type,
        "node_self_loop_weight": node_self_loop_weight,
        "bias": bias,
        "lin_w": lin_w,
        "lin_b": lin_b,
    }


if __name__ == "__main__":
    # Shapes consistent with the module:
    #   2 edge types, in_features per type = [16, 16], hidden = 32, out = 16.
    #   inputs = one tensor per edge + one self-loop tensor.
    in_features = [16, 16]
    hidden_features = 32
    out_features = 16
    num_types = 2

    key = jax.random.PRNGKey(0)
    pkey, ikey = jax.random.split(key)
    params = init_params(pkey, in_features, hidden_features, out_features, num_types)

    types = [0, 1]                  # edge type indices
    edge_weights = [0.7, 1.3]       # per-edge scalar weights

    # N=8 exercises the single full-block path; N=200 exercises a >=2-step grid
    # with a masked partial last row block.
    for num_nodes in (8, 200):
        ikeys = jax.random.split(jax.random.fold_in(ikey, num_nodes), len(types) + 1)
        inputs = [
            jax.random.normal(ikeys[i], (num_nodes, in_features[t]), jnp.float32)
            for i, t in enumerate(types)
        ]
        inputs.append(
            jax.random.normal(ikeys[-1], (num_nodes, in_features[0]), jnp.float32)
        )

        out = jax.block_until_ready(gmta_forward(params, inputs, types, edge_weights))
        assert out.shape == (num_nodes, out_features), out.shape
        out_f32 = out.astype(jnp.float32)

        # Tight check vs a reference using identical bf16-operand matmuls
        # (kernel output is bf16, so allow its ~0.4% output-rounding slack).
        ref_bf16 = jax.block_until_ready(
            gmta_reference_bf16(params, inputs, types, edge_weights))
        assert jnp.allclose(out_f32, ref_bf16, atol=2e-2, rtol=2e-2), (
            f"N={num_nodes}: mismatch vs bf16-matched reference, max abs diff = "
            f"{float(jnp.max(jnp.abs(out_f32 - ref_bf16)))}")

        # Loose check vs the pure-f32 PyTorch-equivalent reference.
        ref_f32 = jax.block_until_ready(
            gmta_reference_f32(params, inputs, types, edge_weights))
        assert jnp.allclose(out_f32, ref_f32, atol=6e-2, rtol=6e-2), (
            f"N={num_nodes}: mismatch vs f32 reference, max abs diff = "
            f"{float(jnp.max(jnp.abs(out_f32 - ref_f32)))}")

    print("KERNEL_OK")
</pallas_src>

<mosaic_0001>
module attributes {stable_mosaic.version = 11 : i64} {
  func.func @kernel(%arg0: i32, %arg1: memref<8x16xf32, #tpu.memory_space<vmem>>, %arg2: memref<8x16xf32, #tpu.memory_space<vmem>>, %arg3: memref<8x16xf32, #tpu.memory_space<vmem>>, %arg4: memref<16x128xbf16, #tpu.memory_space<vmem>>, %arg5: memref<16x128xbf16, #tpu.memory_space<vmem>>, %arg6: memref<16x128xbf16, #tpu.memory_space<vmem>>, %arg7: memref<1x128xf32, #tpu.memory_space<vmem>>, %arg8: memref<128x16xbf16, #tpu.memory_space<vmem>>, %arg9: memref<1x16xf32, #tpu.memory_space<vmem>>, %arg10: memref<8x16xbf16, #tpu.memory_space<vmem>>) attributes {dimension_semantics = [#tpu.dimension_semantics<parallel>], iteration_bounds = array<i64: 1>, scalar_prefetch = 0 : i64, scratch_operands = 0 : i64, tpu.core_type = #tpu.core_type<tc>, window_params = [{transform_indices = @transform_0, window_bounds = array<i64: 8, 16>}, {transform_indices = @transform_1, window_bounds = array<i64: 8, 16>}, {transform_indices = @transform_2, window_bounds = array<i64: 8, 16>}, {pipeline_mode = #tpu.pipeline_mode<synchronous>, transform_indices = @transform_3, window_bounds = array<i64: 16, 128>}, {pipeline_mode = #tpu.pipeline_mode<synchronous>, transform_indices = @transform_4, window_bounds = array<i64: 16, 128>}, {pipeline_mode = #tpu.pipeline_mode<synchronous>, transform_indices = @transform_5, window_bounds = array<i64: 16, 128>}, {pipeline_mode = #tpu.pipeline_mode<synchronous>, transform_indices = @transform_6, window_bounds = array<i64: 1, 128>}, {pipeline_mode = #tpu.pipeline_mode<synchronous>, transform_indices = @transform_7, window_bounds = array<i64: 128, 16>}, {pipeline_mode = #tpu.pipeline_mode<synchronous>, transform_indices = @transform_8, window_bounds = array<i64: 1, 16>}, {transform_indices = @transform_9, window_bounds = array<i64: 8, 16>}]} {
    %c0 = arith.constant 0 : index
    %c0_0 = arith.constant 0 : index
    %0 = vector.load %arg1[%c0, %c0_0] : memref<8x16xf32, #tpu.memory_space<vmem>>, vector<8x16xf32>
    %1 = arith.truncf %0 : vector<8x16xf32> to vector<8x16xbf16>
    %c0_1 = arith.constant 0 : index
    %c0_2 = arith.constant 0 : index
    %2 = vector.load %arg4[%c0_1, %c0_2] : memref<16x128xbf16, #tpu.memory_space<vmem>>, vector<16x128xbf16>
    %cst = arith.constant dense<0.000000e+00> : vector<8x128xf32>
    %3 = tpu.matmul %1, %2, %cst {dimension_numbers = #tpu.dot_dimension_numbers<[1], [0], [0], [1], [0, 0, 1, 1], [], []>} : vector<8x16xbf16>, vector<16x128xbf16>, vector<8x128xf32> -> vector<8x128xf32>
    %c0_3 = arith.constant 0 : index
    %c0_4 = arith.constant 0 : index
    %4 = vector.load %arg2[%c0_3, %c0_4] : memref<8x16xf32, #tpu.memory_space<vmem>>, vector<8x16xf32>
    %5 = arith.truncf %4 : vector<8x16xf32> to vector<8x16xbf16>
    %c0_5 = arith.constant 0 : index
    %c0_6 = arith.constant 0 : index
    %6 = vector.load %arg5[%c0_5, %c0_6] : memref<16x128xbf16, #tpu.memory_space<vmem>>, vector<16x128xbf16>
    %cst_7 = arith.constant dense<0.000000e+00> : vector<8x128xf32>
    %7 = tpu.matmul %5, %6, %cst_7 {dimension_numbers = #tpu.dot_dimension_numbers<[1], [0], [0], [1], [0, 0, 1, 1], [], []>} : vector<8x16xbf16>, vector<16x128xbf16>, vector<8x128xf32> -> vector<8x128xf32>
    %8 = arith.addf %3, %7 : vector<8x128xf32>
    %c0_8 = arith.constant 0 : index
    %c0_9 = arith.constant 0 : index
    %9 = vector.load %arg3[%c0_8, %c0_9] : memref<8x16xf32, #tpu.memory_space<vmem>>, vector<8x16xf32>
    %10 = arith.truncf %9 : vector<8x16xf32> to vector<8x16xbf16>
    %c0_10 = arith.constant 0 : index
    %c0_11 = arith.constant 0 : index
    %11 = vector.load %arg6[%c0_10, %c0_11] : memref<16x128xbf16, #tpu.memory_space<vmem>>, vector<16x128xbf16>
    %cst_12 = arith.constant dense<0.000000e+00> : vector<8x128xf32>
    %12 = tpu.matmul %10, %11, %cst_12 {dimension_numbers = #tpu.dot_dimension_numbers<[1], [0], [0], [1], [0, 0, 1, 1], [], []>} : vector<8x16xbf16>, vector<16x128xbf16>, vector<8x128xf32> -> vector<8x128xf32>
    %13 = arith.addf %8, %12 : vector<8x128xf32>
    %c0_13 = arith.constant 0 : index
    %c0_14 = arith.constant 0 : index
    %14 = vector.load %arg7[%c0_13, %c0_14] : memref<1x128xf32, #tpu.memory_space<vmem>>, vector<1x128xf32>
    %15 = vector.broadcast %14 : vector<1x128xf32> to vector<8x128xf32>
    %16 = arith.addf %13, %15 : vector<8x128xf32>
    %cst_15 = arith.constant 0.000000e+00 : f32
    %17 = vector.broadcast %cst_15 : f32 to vector<8x128xf32>
    %18 = arith.maximumf %16, %17 : vector<8x128xf32>
    %19 = arith.truncf %18 : vector<8x128xf32> to vector<8x128xbf16>
    %c0_16 = arith.constant 0 : index
    %c0_17 = arith.constant 0 : index
    %20 = vector.load %arg8[%c0_16, %c0_17] : memref<128x16xbf16, #tpu.memory_space<vmem>>, vector<128x16xbf16>
    %cst_18 = arith.constant dense<0.000000e+00> : vector<8x16xf32>
    %21 = tpu.matmul %19, %20, %cst_18 {dimension_numbers = #tpu.dot_dimension_numbers<[1], [0], [0], [1], [0, 0, 1, 1], [], []>} : vector<8x128xbf16>, vector<128x16xbf16>, vector<8x16xf32> -> vector<8x16xf32>
    %c0_19 = arith.constant 0 : index
    %c0_20 = arith.constant 0 : index
    %22 = vector.load %arg9[%c0_19, %c0_20] : memref<1x16xf32, #tpu.memory_space<vmem>>, vector<1x16xf32>
    %23 = vector.broadcast %22 : vector<1x16xf32> to vector<8x16xf32>
    %24 = arith.addf %21, %23 : vector<8x16xf32>
    %cst_21 = arith.constant 0.000000e+00 : f32
    %25 = vector.broadcast %cst_21 : f32 to vector<8x16xf32>
    %26 = arith.maximumf %24, %25 : vector<8x16xf32>
    %27 = arith.truncf %26 : vector<8x16xf32> to vector<8x16xbf16>
    %c0_22 = arith.constant 0 : index
    %c0_23 = arith.constant 0 : index
    %28 = vector.load %arg10[%c0_22, %c0_23] : memref<8x16xbf16, #tpu.memory_space<vmem>>, vector<8x16xbf16>
    tpu.vector_store %arg10[%c0_22, %c0_23], %27 {strides = array<i32>} : memref<8x16xbf16, #tpu.memory_space<vmem>>, vector<8x16xbf16>,
    return
  }
  func.func @transform_0(%arg0: i32) -> (i32, i32) {
    %c0_i32 = arith.constant 0 : i32
    %c0_i32_0 = arith.constant 0 : i32
    return %arg0, %c0_i32 : i32, i32
  }
  func.func @transform_1(%arg0: i32) -> (i32, i32) {
    %c0_i32 = arith.constant 0 : i32
    %c0_i32_0 = arith.constant 0 : i32
    return %arg0, %c0_i32 : i32, i32
  }
  func.func @transform_2(%arg0: i32) -> (i32, i32) {
    %c0_i32 = arith.constant 0 : i32
    %c0_i32_0 = arith.constant 0 : i32
    return %arg0, %c0_i32 : i32, i32
  }
  func.func @transform_3(%arg0: i32) -> (i32, i32) {
    %c0_i32 = arith.constant 0 : i32
    %c0_i32_0 = arith.constant 0 : i32
    %c0_i32_1 = arith.constant 0 : i32
    return %c0_i32, %c0_i32_0 : i32, i32
  }
  func.func @transform_4(%arg0: i32) -> (i32, i32) {
    %c0_i32 = arith.constant 0 : i32
    %c0_i32_0 = arith.constant 0 : i32
    %c0_i32_1 = arith.constant 0 : i32
    return %c0_i32, %c0_i32_0 : i32, i32
  }
  func.func @transform_5(%arg0: i32) -> (i32, i32) {
    %c0_i32 = arith.constant 0 : i32
    %c0_i32_0 = arith.constant 0 : i32
    %c0_i32_1 = arith.constant 0 : i32
    return %c0_i32, %c0_i32_0 : i32, i32
  }
  func.func @transform_6(%arg0: i32) -> (i32, i32) {
    %c0_i32 = arith.constant 0 : i32
    %c0_i32_0 = arith.constant 0 : i32
    %c0_i32_1 = arith.constant 0 : i32
    return %c0_i32, %c0_i32_0 : i32, i32
  }
  func.func @transform_7(%arg0: i32) -> (i32, i32) {
    %c0_i32 = arith.constant 0 : i32
    %c0_i32_0 = arith.constant 0 : i32
    %c0_i32_1 = arith.constant 0 : i32
    return %c0_i32, %c0_i32_0 : i32, i32
  }
  func.func @transform_8(%arg0: i32) -> (i32, i32) {
    %c0_i32 = arith.constant 0 : i32
    %c0_i32_0 = arith.constant 0 : i32
    %c0_i32_1 = arith.constant 0 : i32
    return %c0_i32, %c0_i32_0 : i32, i32
  }
  func.func @transform_9(%arg0: i32) -> (i32, i32) {
    %c0_i32 = arith.constant 0 : i32
    %c0_i32_0 = arith.constant 0 : i32
    return %arg0, %c0_i32 : i32, i32
  }
}

</mosaic_0001>

<llo_original>
// kernel: tpu_custom_call.1
$region0: #{tpu_custom_call.1}
  #allocation0 [shape = 'u32[]', space=smem, size = 0x4, offset = 0x4, fixed_abs, tag = 'smem constant byte address 0x4 - core index']
  #allocation1 [shape = 'u32[144,128]{1,0:T(1,128)}', space=vmem, size = 0x12000, scoped, tag = 'internal scratch']
  %s0 = inlined_call_operand.vmem [shape: f32[8,16], index: 0, kind: input, shape index: {}]
  %s1 = inlined_call_operand.vmem [shape: f32[8,16], index: 1, kind: input, shape index: {}]
  %s2 = inlined_call_operand.vmem [shape: f32[8,16], index: 2, kind: input, shape index: {}]
  %s3 = inlined_call_operand.vmem [shape: bf16[16,128], index: 3, kind: input, shape index: {}]
  %s4 = inlined_call_operand.vmem [shape: bf16[16,128], index: 4, kind: input, shape index: {}]
  %s5 = inlined_call_operand.vmem [shape: bf16[16,128], index: 5, kind: input, shape index: {}]
  %s6 = inlined_call_operand.vmem [shape: f32[1,128], index: 6, kind: input, shape index: {}]
  %s7 = inlined_call_operand.vmem [shape: bf16[128,16], index: 7, kind: input, shape index: {}]
  %s8 = inlined_call_operand.vmem [shape: f32[1,16], index: 8, kind: input, shape index: {}]
  %s9 = inlined_call_operand.hbm [shape: bf16[8,16], index: 9, kind: output, shape index: {}]
  %s10 = sld [smem:[#allocation0]]
  $region46: #{tpu_custom_call.1} parent=0
    _
  %s12 = ssub.s32 1, %s10
  %s13 = scalar_select 0, %s12, %s10
  $region1: #{tpu_custom_call.1} parent=0
    #allocation2 [shape = 'u8[2048]{0}', space=vmem, size = 0x800, scoped, tag = 'output window, operand 0, single buffered']
    #allocation3 [shape = 's32[1]{0}', space=sflag, size = 0x4, scoped, tag = 'scoped memory for tpu_custom_call.1']
    %14 = vsyncpa [#allocation3], 0
    // Predicated region
    $region2: #{tpu_custom_call.1} parent=1 // pred_check
      _
    $region3: #{tpu_custom_call.1} parent=1 // pred_check_branch
      %16 = sbr.rel (0) target = $region5
    $region4: #{tpu_custom_call.1} parent=1 // pred_region
      _
    $region5: #{tpu_custom_call.1} parent=1 // pred_fallthru
      _
    // Predicated region
    $region6: #{tpu_custom_call.1} parent=1 // pred_check
      _
    $region7: #{tpu_custom_call.1} parent=1 // pred_check_branch
      %18 = sbr.rel (0) target = $region9
    $region8: #{tpu_custom_call.1} parent=1 // pred_region
      _
    $region9: #{tpu_custom_call.1} parent=1 // pred_fallthru
      _
    // Predicated region
    $region10: #{tpu_custom_call.1} parent=1 // pred_check
      _
    $region11: #{tpu_custom_call.1} parent=1 // pred_check_branch
      %20 = sbr.rel (0) target = $region13
    $region12: #{tpu_custom_call.1} parent=1 // pred_region
      _
    $region13: #{tpu_custom_call.1} parent=1 // pred_fallthru
      _
    // Predicated region
    $region14: #{tpu_custom_call.1} parent=1 // pred_check
      _
    $region15: #{tpu_custom_call.1} parent=1 // pred_check_branch
      %22 = sbr.rel (0) target = $region17
    $region16: #{tpu_custom_call.1} parent=1 // pred_region
      _
    $region17: #{tpu_custom_call.1} parent=1 // pred_fallthru
      _
    // Predicated region
    $region18: #{tpu_custom_call.1} parent=1 // pred_check
      _
    $region19: #{tpu_custom_call.1} parent=1 // pred_check_branch
      %24 = sbr.rel (0) target = $region21
    $region20: #{tpu_custom_call.1} parent=1 // pred_region
      _
    $region21: #{tpu_custom_call.1} parent=1 // pred_fallthru
      _
    // Predicated region
    $region22: #{tpu_custom_call.1} parent=1 // pred_check
      _
    $region23: #{tpu_custom_call.1} parent=1 // pred_check_branch
      %26 = sbr.rel (0) target = $region25
    $region24: #{tpu_custom_call.1} parent=1 // pred_region
      _
    $region25: #{tpu_custom_call.1} parent=1 // pred_fallthru
      _
    // Predicated region
    $region26: #{tpu_custom_call.1} parent=1 // pred_check
      _
    $region27: #{tpu_custom_call.1} parent=1 // pred_check_branch
      %28 = sbr.rel (0) target = $region29
    $region28: #{tpu_custom_call.1} parent=1 // pred_region
      _
    $region29: #{tpu_custom_call.1} parent=1 // pred_fallthru
      _
    // Predicated region
    $region30: #{tpu_custom_call.1} parent=1 // pred_check
      _
    $region31: #{tpu_custom_call.1} parent=1 // pred_check_branch
      %30 = sbr.rel (0) target = $region33
    $region32: #{tpu_custom_call.1} parent=1 // pred_region
      _
    $region33: #{tpu_custom_call.1} parent=1 // pred_fallthru
      _
    // Predicated region
    $region34: #{tpu_custom_call.1} parent=1 // pred_check
      _
    $region35: #{tpu_custom_call.1} parent=1 // pred_check_branch
      %32 = sbr.rel (0) target = $region37
    $region36: #{tpu_custom_call.1} parent=1 // pred_region
      _
    $region37: #{tpu_custom_call.1} parent=1 // pred_fallthru
      _
    %v34 = vld [vmem:[%s0] sm:$0xff]
    %v35 = vpack.c.bf16 %v34, %v34
    %v36 = vld [vmem:[%s3] sm:$0xf]
    %v37 = vld [vmem:[%s3 + $0x4] sm:$0xf]
    %v38 = vld [vmem:[%s1] sm:$0xff]
    %v39 = vpack.c.bf16 %v38, %v38
    %v40 = vld [vmem:[%s4] sm:$0xf]
    %v41 = vld [vmem:[%s4 + $0x4] sm:$0xf]
    %v44 = vunpack.c.l.b16 %v40
    %v45 = vunpack.c.l.b16 %v41
    %v46 = vpack.c.b16 %v45, %v44
    %vm48 = vcmask 130048
    %v50 = vsel %vm48, %v39, 0
    %52 = vmatprep.subr.bf16.mxu0 0
    %53 = vmatpush1.bf16.msra.mxu0 %v46
    %54 = vmatprep.subr.bf16.mxu0 0
    %55 = vmatpush1.bf16.msra.mxu0 0
    %56 = vmatprep.subr.bf16.mxu0 0
    %57 = vmatpush1.bf16.msra.mxu0 0
    %58 = vmatprep.subr.bf16.mxu0 0
    %59 = vmatpush1.bf16.msra.mxu0 0
    %60 = vmatprep.subr.bf16.mxu0 0
    %61 = vmatpush1.bf16.msra.mxu0 0
    %62 = vmatprep.subr.bf16.mxu0 0
    %63 = vmatpush1.bf16.msra.mxu0 0
    %64 = vmatprep.subr.bf16.mxu0 0
    %65 = vmatpush1.bf16.msra.mxu0 0
    %66 = vmatprep.subr.bf16.mxu0 0
    %67 = vmatpush1.bf16.msra.mxu0 0
    %68 = vmatprep.subr.bf16.mxu0 0
    %69 = vmatpush1.bf16.msra.mxu0 0
    %70 = vmatprep.subr.bf16.mxu0 0
    %71 = vmatpush1.bf16.msra.mxu0 0
    %72 = vmatprep.subr.bf16.mxu0 0
    %73 = vmatpush1.bf16.msra.mxu0 0
    %74 = vmatprep.subr.bf16.mxu0 0
    %75 = vmatpush1.bf16.msra.mxu0 0
    %76 = vmatprep.subr.bf16.mxu0 0
    %77 = vmatpush1.bf16.msra.mxu0 0
    %78 = vmatprep.subr.bf16.mxu0 0
    %79 = vmatpush1.bf16.msra.mxu0 0
    %80 = vmatprep.subr.bf16.mxu0 0
    %81 = vmatpush1.bf16.msra.mxu0 0
    %82 = vmatprep.subr.bf16.mxu0 0
    %83 = vmatpush1.bf16.msra.mxu0 0
    %84 = vmatprep.mubr.bf16.mxu0 0
    %85 = vmatmul.mubr.bf16.gmra.mrb[0].mxu0 %v50
    %v86 = vpop.f32.mrb[0].mxu0
    %v87 = vadd.f32 0.0, %v86
    %v88 = vpop.f32.mrb[0].mxu0
    %v89 = vpop.f32.mrb[0].mxu0
    %v90 = vpop.f32.mrb[0].mxu0
    %91 = vdwg.mxu0
    %v94 = vunpack.c.l.b16 %v36
    %v95 = vunpack.c.l.b16 %v37
    %v96 = vpack.c.b16 %v95, %v94
    %v99 = vsel %vm48, %v35, 0
    %101 = vmatprep.subr.bf16.mxu0 0
    %102 = vmatpush1.bf16.msra.mxu0 %v96
    %103 = vmatprep.subr.bf16.mxu0 0
    %104 = vmatpush1.bf16.msra.mxu0 0
    %105 = vmatprep.subr.bf16.mxu0 0
    %106 = vmatpush1.bf16.msra.mxu0 0
    %107 = vmatprep.subr.bf16.mxu0 0
    %108 = vmatpush1.bf16.msra.mxu0 0
    %109 = vmatprep.subr.bf16.mxu0 0
    %110 = vmatpush1.bf16.msra.mxu0 0
    %111 = vmatprep.subr.bf16.mxu0 0
    %112 = vmatpush1.bf16.msra.mxu0 0
    %113 = vmatprep.subr.bf16.mxu0 0
    %114 = vmatpush1.bf16.msra.mxu0 0
    %115 = vmatprep.subr.bf16.mxu0 0
    %116 = vmatpush1.bf16.msra.mxu0 0
    %117 = vmatprep.subr.bf16.mxu0 0
    %118 = vmatpush1.bf16.msra.mxu0 0
    %119 = vmatprep.subr.bf16.mxu0 0
    %120 = vmatpush1.bf16.msra.mxu0 0
    %121 = vmatprep.subr.bf16.mxu0 0
    %122 = vmatpush1.bf16.msra.mxu0 0
    %123 = vmatprep.subr.bf16.mxu0 0
    %124 = vmatpush1.bf16.msra.mxu0 0
    %125 = vmatprep.subr.bf16.mxu0 0
    %126 = vmatpush1.bf16.msra.mxu0 0
    %127 = vmatprep.subr.bf16.mxu0 0
    %128 = vmatpush1.bf16.msra.mxu0 0
    %129 = vmatprep.subr.bf16.mxu0 0
    %130 = vmatpush1.bf16.msra.mxu0 0
    %131 = vmatprep.subr.bf16.mxu0 0
    %132 = vmatpush1.bf16.msra.mxu0 0
    %133 = vmatprep.mubr.bf16.mxu0 0
    %134 = vmatmul.mubr.bf16.gmra.mrb[0].mxu0 %v99
    %v135 = vpop.f32.mrb[0].mxu0
    %v136 = vadd.f32 %v87, %v135
    %v137 = vpop.f32.mrb[0].mxu0
    %v138 = vpop.f32.mrb[0].mxu0
    %v139 = vpop.f32.mrb[0].mxu0
    %140 = vdwg.mxu0
    %v141 = vld [vmem:[%s2] sm:$0xff]
    %v142 = vpack.c.bf16 %v141, %v141
    %v143 = vld [vmem:[%s5] sm:$0xf]
    %v144 = vld [vmem:[%s5 + $0x4] sm:$0xf]
    %v147 = vunpack.c.l.b16 %v143
    %v148 = vunpack.c.l.b16 %v144
    %v149 = vpack.c.b16 %v148, %v147
    %v152 = vsel %vm48, %v142, 0
    %154 = vmatprep.subr.bf16.mxu0 0
    %155 = vmatpush1.bf16.msra.mxu0 %v149
    %156 = vmatprep.subr.bf16.mxu0 0
    %157 = vmatpush1.bf16.msra.mxu0 0
    %158 = vmatprep.subr.bf16.mxu0 0
    %159 = vmatpush1.bf16.msra.mxu0 0
    %160 = vmatprep.subr.bf16.mxu0 0
    %161 = vmatpush1.bf16.msra.mxu0 0
    %162 = vmatprep.subr.bf16.mxu0 0
    %163 = vmatpush1.bf16.msra.mxu0 0
    %164 = vmatprep.subr.bf16.mxu0 0
    %165 = vmatpush1.bf16.msra.mxu0 0
    %166 = vmatprep.subr.bf16.mxu0 0
    %167 = vmatpush1.bf16.msra.mxu0 0
    %168 = vmatprep.subr.bf16.mxu0 0
    %169 = vmatpush1.bf16.msra.mxu0 0
    %170 = vmatprep.subr.bf16.mxu0 0
    %171 = vmatpush1.bf16.msra.mxu0 0
    %172 = vmatprep.subr.bf16.mxu0 0
    %173 = vmatpush1.bf16.msra.mxu0 0
    %174 = vmatprep.subr.bf16.mxu0 0
    %175 = vmatpush1.bf16.msra.mxu0 0
    %176 = vmatprep.subr.bf16.mxu0 0
    %177 = vmatpush1.bf16.msra.mxu0 0
    %178 = vmatprep.subr.bf16.mxu0 0
    %179 = vmatpush1.bf16.msra.mxu0 0
    %180 = vmatprep.subr.bf16.mxu0 0
    %181 = vmatpush1.bf16.msra.mxu0 0
    %182 = vmatprep.subr.bf16.mxu0 0
    %183 = vmatpush1.bf16.msra.mxu0 0
    %184 = vmatprep.subr.bf16.mxu0 0
    %185 = vmatpush1.bf16.msra.mxu0 0
    %186 = vmatprep.mubr.bf16.mxu0 0
    %187 = vmatmul.mubr.bf16.gmra.mrb[0].mxu0 %v152
    %v188 = vpop.f32.mrb[0].mxu0
    %v189 = vadd.f32 0.0, %v188
    %v190 = vpop.f32.mrb[0].mxu0
    %v191 = vpop.f32.mrb[0].mxu0
    %v192 = vpop.f32.mrb[0].mxu0
    %193 = vdwg.mxu0
    %v194 = vadd.f32 %v136, %v189
    %v195 = vld [vmem:[%s6] sm:$0x1]
    %v197 = vlaneseq
    %v198 = vshrl.u32 %v197, 7
    %v199 = vsub.s32 0, %v198
    %v200 = vrot.slane %v195, %v199
    %v202 = vadd.f32 %v194, %v200
    %v203 = vmax.f32 %v202, 0.0
    %v204 = vpack.c.bf16 %v203, %v203
    %v205 = vld [vmem:[%s7] sm:$0xf]
    %v206 = vld [vmem:[%s7 + $0x4] sm:$0xf]
    %v207 = vld [vmem:[%s7 + $0x8] sm:$0xf]
    %v208 = vld [vmem:[%s7 + $0xc] sm:$0xf]
    %v209 = vld [vmem:[%s7 + $0x10] sm:$0xf]
    %v210 = vld [vmem:[%s7 + $0x14] sm:$0xf]
    %v211 = vld [vmem:[%s7 + $0x18] sm:$0xf]
    %v212 = vld [vmem:[%s7 + $0x1c] sm:$0xf]
    %v213 = vld [vmem:[%s7 + $0x20] sm:$0xf]
    %v214 = vld [vmem:[%s7 + $0x24] sm:$0xf]
    %v215 = vld [vmem:[%s7 + $0x28] sm:$0xf]
    %v216 = vld [vmem:[%s7 + $0x2c] sm:$0xf]
    %v217 = vld [vmem:[%s7 + $0x30] sm:$0xf]
    %v218 = vld [vmem:[%s7 + $0x34] sm:$0xf]
    %v219 = vld [vmem:[%s7 + $0x38] sm:$0xf]
    %v220 = vld [vmem:[%s7 + $0x3c] sm:$0xf]
    %v221 = vld [vmem:[%s8] sm:$0x1]
    %v223 = vlaneseq
    %v224 = vshrl.u32 %v223, 7
    %v225 = vsub.s32 0, %v224
    %v226 = vrot.slane %v221, %v225
    %v244 = vunpack.c.l.b16 %v205
    %v245 = vunpack.c.l.b16 %v206
    %v246 = vunpack.c.l.b16 %v207
    %v247 = vunpack.c.l.b16 %v208
    %v248 = vunpack.c.l.b16 %v209
    %v249 = vunpack.c.l.b16 %v210
    %v250 = vunpack.c.l.b16 %v211
    %v251 = vunpack.c.l.b16 %v212
    %v252 = vunpack.c.l.b16 %v213
    %v253 = vunpack.c.l.b16 %v214
    %v254 = vunpack.c.l.b16 %v215
    %v255 = vunpack.c.l.b16 %v216
    %v256 = vunpack.c.l.b16 %v217
    %v257 = vunpack.c.l.b16 %v218
    %v258 = vunpack.c.l.b16 %v219
    %v259 = vunpack.c.l.b16 %v220
    %v260 = vpack.c.b16 %v245, %v244
    %v261 = vpack.c.b16 %v247, %v246
    %v262 = vpack.c.b16 %v249, %v248
    %v263 = vpack.c.b16 %v251, %v250
    %v264 = vpack.c.b16 %v253, %v252
    %v265 = vpack.c.b16 %v255, %v254
    %v266 = vpack.c.b16 %v257, %v256
    %v267 = vpack.c.b16 %v259, %v258
    %276 = vmatprep.subr.bf16.mxu0 0
    %277 = vmatpush1.bf16.msra.mxu0 %v260
    %278 = vmatprep.subr.bf16.mxu0 0
    %279 = vmatpush1.bf16.msra.mxu0 %v261
    %280 = vmatprep.subr.bf16.mxu0 0
    %281 = vmatpush1.bf16.msra.mxu0 %v262
    %282 = vmatprep.subr.bf16.mxu0 0
    %283 = vmatpush1.bf16.msra.mxu0 %v263
    %284 = vmatprep.subr.bf16.mxu0 0
    %285 = vmatpush1.bf16.msra.mxu0 %v264
    %286 = vmatprep.subr.bf16.mxu0 0
    %287 = vmatpush1.bf16.msra.mxu0 %v265
    %288 = vmatprep.subr.bf16.mxu0 0
    %289 = vmatpush1.bf16.msra.mxu0 %v266
    %290 = vmatprep.subr.bf16.mxu0 0
    %291 = vmatpush1.bf16.msra.mxu0 %v267
    %292 = vmatprep.subr.bf16.mxu0 0
    %293 = vmatpush1.bf16.msra.mxu0 0
    %294 = vmatprep.subr.bf16.mxu0 0
    %295 = vmatpush1.bf16.msra.mxu0 0
    %296 = vmatprep.subr.bf16.mxu0 0
    %297 = vmatpush1.bf16.msra.mxu0 0
    %298 = vmatprep.subr.bf16.mxu0 0
    %299 = vmatpush1.bf16.msra.mxu0 0
    %300 = vmatprep.subr.bf16.mxu0 0
    %301 = vmatpush1.bf16.msra.mxu0 0
    %302 = vmatprep.subr.bf16.mxu0 0
    %303 = vmatpush1.bf16.msra.mxu0 0
    %304 = vmatprep.subr.bf16.mxu0 0
    %305 = vmatpush1.bf16.msra.mxu0 0
    %306 = vmatprep.subr.bf16.mxu0 0
    %307 = vmatpush1.bf16.msra.mxu0 0
    %308 = vmatprep.mubr.bf16.mxu0 0
    %309 = vmatmul.mubr.bf16.gmra.mrb[0].mxu0 %v204
    %v310 = vpop.f32.mrb[0].mxu0
    %v311 = vadd.f32 %v226, %v310
    %v312 = vpop.f32.mrb[0].mxu0
    %v313 = vpop.f32.mrb[0].mxu0
    %v314 = vpop.f32.mrb[0].mxu0
    %315 = vdwg.mxu0
    %v316 = vmax.f32 %v311, 0.0
    %v317 = vpack.c.bf16 %v316, %v316
    %vm318 = vcmask 125952
    %319 = vst.msk [vmem:[#allocation2] sm:$0xf] %vm318, %v317
    // Predicated region
    $region38: #{tpu_custom_call.1} parent=1 // pred_check
      _
    $region39: #{tpu_custom_call.1} parent=1 // pred_check_branch
      %321 = sbr.rel (0) target = $region41
    $region40: #{tpu_custom_call.1} parent=1 // pred_region
      %s323 = ssub.s32 64, 64
      %324 = vsyncadd [#allocation3], %s323
      %s326 = sshll.u32 [#allocation2], 4
      %s327 = int_to_ptr.vmem [resolvable:$true] %s326
      %329 = dma.vmem_to_hbm [thread:$0]  %s327, 64, %s9, [#allocation3]
    $region41: #{tpu_custom_call.1} parent=1 // pred_fallthru
      _
    // Predicated region
    $region42: #{tpu_custom_call.1} parent=1 // pred_check
      _
    $region43: #{tpu_custom_call.1} parent=1 // pred_check_branch
      %331 = sbr.rel (0) target = $region45
    $region44: #{tpu_custom_call.1} parent=1 // pred_region
      %332 = dma.done [#allocation3], 64
    $region45: #{tpu_custom_call.1} parent=1 // pred_fallthru
      _
    %333 = vsyncpa [#allocation3], 1

</llo_original>
